<compile_context>
chip_gen: v7x
topology: tpu7x:2x2x1
jax: 0.10.0
libtpu: 0.0.40
codegen_flags: <defaults>
</compile_context>

<pallas_src>
import math

import jax
import jax.numpy as jnp
from jax.experimental import pallas as pl
from jax.experimental.pallas import tpu as pltpu

_TILE_BYTES = 2 * 1024 * 1024           # per-buffer tile target (safe on all gens)
_MAX_SINGLE_BLOCK_BYTES = 4 * 1024 * 1024


def _copy_kernel(x_ref, o_ref):
    # Pure identity copy of one (TB, LANE) tile; the reshape itself happened
    # in the wrapper as free layout plumbing.
    o_ref[...] = x_ref[...]


def _choose_tiling(total_elems, itemsize):
    """Pick a lane-dense 2-D slab (rows, lane) and a row block TB.

    Returns (rows, lane, tb) or None if no lane-dense tiling exists, in which
    case the caller falls back to a plain XLA reshape (which is free anyway).
    """
    lane = None
    for cand in (1024, 512, 256, 128):
        if total_elems % cand == 0:
            lane = cand
            break
    if lane is None:
        return None
    rows = total_elems // lane

    if rows <= 8:
        # Single block equal to the full array dims (allowed even if rows < 8).
        return rows, lane, rows

    # Largest multiple of 8 that divides rows and keeps the tile <= ~2 MiB.
    target_rows = max(8, _TILE_BYTES // (lane * itemsize))
    tb = 0
    for cand in range(8, min(rows, target_rows) + 1, 8):
        if rows % cand == 0:
            tb = cand
    if tb == 0:
        # No dividing multiple-of-8 block; use one full-array block if small.
        if rows * lane * itemsize <= _MAX_SINGLE_BLOCK_BYTES:
            return rows, lane, rows
        return None
    return rows, lane, tb


def reshape_pallas(x, out_shape):
    """Equivalent of torch `x.view(-1, *out_shape)`."""
    out_shape = tuple(int(d) for d in out_shape)
    total = x.size
    tail = math.prod(out_shape)
    assert total % tail == 0, "input size must be divisible by prod(out_shape)"
    final_shape = (total // tail, *out_shape)

    tiling = _choose_tiling(total, jnp.dtype(x.dtype).itemsize)
    if tiling is None:
        # TODO(synk): no lane-dense (multiple-of-128) tiling exists for this
        # size; a plain XLA reshape (pure metadata, zero copies) is optimal.
        return x.reshape(final_shape)

    rows, lane, tb = tiling
    slab = x.reshape(rows, lane)      # wrapper-side reshape: metadata only
    grid = (rows // tb,)

    out = pl.pallas_call(
        _copy_kernel,
        out_shape=jax.ShapeDtypeStruct((rows, lane), x.dtype),
        grid=grid,
        in_specs=[pl.BlockSpec((tb, lane), lambda i: (i, 0))],
        out_specs=pl.BlockSpec((tb, lane), lambda i: (i, 0)),
        compiler_params=pltpu.CompilerParams(
            dimension_semantics=("parallel",),
            vmem_limit_bytes=32 * 1024 * 1024,
        ),
    )(slab)
    return out.reshape(final_shape)


if __name__ == "__main__":
    key = jax.random.PRNGKey(0)

    # Case 1: flatten an NCL tensor (batch=2, channels=4, length=16) -> (2, 64)
    x1 = jax.random.normal(key, (2, 4, 16), dtype=jnp.float32)
    y1 = reshape_pallas(x1, (64,))
    jax.block_until_ready(y1)
    assert y1.shape == (2, 64)
    assert jnp.array_equal(y1, x1.reshape(-1, 64))

    # Case 2: un-flatten (2, 64) -> (2, 4, 16) (multi-dim out_shape)
    x2 = jax.random.normal(jax.random.PRNGKey(1), (2, 64), dtype=jnp.float32)
    y2 = reshape_pallas(x2, (4, 16))
    jax.block_until_ready(y2)
    assert y2.shape == (2, 4, 16)
    assert jnp.array_equal(y2, x2.reshape(-1, 4, 16))

    # Case 3: exercises the blocked path (rows > 8, TB a multiple of 8, lane=1024)
    x3 = jax.random.normal(jax.random.PRNGKey(2), (16, 8, 128), dtype=jnp.float32)
    y3 = reshape_pallas(x3, (8 * 128,))
    jax.block_until_ready(y3)
    assert y3.shape == (16, 1024)
    assert jnp.array_equal(y3, x3.reshape(-1, 8 * 128))

    print("KERNEL_OK")
</pallas_src>

<mosaic_0001>
module attributes {stable_mosaic.version = 11 : i64} {
  func.func @_copy_kernel(%arg0: i32, %arg1: memref<1x128xf32, #tpu.memory_space<vmem>>, %arg2: memref<1x128xf32, #tpu.memory_space<vmem>>) attributes {dimension_semantics = [#tpu.dimension_semantics<parallel>], iteration_bounds = array<i64: 1>, scalar_prefetch = 0 : i64, scratch_operands = 0 : i64, tpu.core_type = #tpu.core_type<tc>, window_params = [{transform_indices = @transform_0, window_bounds = array<i64: 1, 128>}, {transform_indices = @transform_1, window_bounds = array<i64: 1, 128>}]} {
    %c0 = arith.constant 0 : index
    %c0_0 = arith.constant 0 : index
    %0 = vector.load %arg1[%c0, %c0_0] : memref<1x128xf32, #tpu.memory_space<vmem>>, vector<1x128xf32>
    %c0_1 = arith.constant 0 : index
    %c0_2 = arith.constant 0 : index
    %1 = vector.load %arg2[%c0_1, %c0_2] : memref<1x128xf32, #tpu.memory_space<vmem>>, vector<1x128xf32>
    tpu.vector_store %arg2[%c0_1, %c0_2], %0 {strides = array<i32>} : memref<1x128xf32, #tpu.memory_space<vmem>>, vector<1x128xf32>,
    return
  }
  func.func @transform_0(%arg0: i32) -> (i32, i32) {
    %c0_i32 = arith.constant 0 : i32
    %c0_i32_0 = arith.constant 0 : i32
    return %arg0, %c0_i32 : i32, i32
  }
  func.func @transform_1(%arg0: i32) -> (i32, i32) {
    %c0_i32 = arith.constant 0 : i32
    %c0_i32_0 = arith.constant 0 : i32
    return %arg0, %c0_i32 : i32, i32
  }
}

</mosaic_0001>

<llo_original>
// kernel: tpu_custom_call.1
$region0: #{tpu_custom_call.1}
  #allocation0 [shape = 'u32[]', space=smem, size = 0x4, offset = 0x4, fixed_abs, tag = 'smem constant byte address 0x4 - core index']
  #allocation1 [shape = 'u32[144,128]{1,0:T(1,128)}', space=vmem, size = 0x12000, scoped, tag = 'internal scratch']
  %s0 = inlined_call_operand.hbm [shape: f32[1,128], index: 0, kind: input, shape index: {}]
  %s1 = inlined_call_operand.hbm [shape: f32[1,128], index: 1, kind: output, shape index: {}]
  %s2 = sld [smem:[#allocation0]]
  $region18: #{tpu_custom_call.1} parent=0
    _
  %s4 = ssub.s32 1, %s2
  %s5 = scalar_select 0, %s4, %s2
  $region1: #{tpu_custom_call.1} parent=0
    #allocation2 [shape = 'u8[512]{0}', space=vmem, size = 0x400, scoped, tag = 'input window, operand 0, single buffered']
    #allocation3 [shape = 's32[1]{0}', space=sflag, size = 0x4, scoped, tag = 'scoped memory for tpu_custom_call.1']
    #allocation4 [shape = 's32[1]{0}', space=sflag, size = 0x4, scoped, tag = 'scoped memory for tpu_custom_call.1']
    #allocation5 [shape = 'u8[512]{0}', space=vmem, size = 0x400, scoped, tag = 'output window, operand 0, single buffered']
    %6 = vsyncpa [#allocation3], 0
    %7 = vsyncpa [#allocation4], 0
    // Predicated region
    $region2: #{tpu_custom_call.1} parent=1 // pred_check
      _
    $region3: #{tpu_custom_call.1} parent=1 // pred_check_branch
      %9 = sbr.rel (0) target = $region5
    $region4: #{tpu_custom_call.1} parent=1 // pred_region
      %s11 = ssub.s32 16, 16
      %12 = vsyncadd [#allocation3], %s11
      %s14 = sshll.u32 [#allocation2], 4
      %s15 = int_to_ptr.vmem [resolvable:$true] %s14
      %17 = dma.hbm_to_vmem [thread:$0]  %s0, 16, %s15, [#allocation3]
    $region5: #{tpu_custom_call.1} parent=1 // pred_fallthru
      _
    // Predicated region
    $region6: #{tpu_custom_call.1} parent=1 // pred_check
      _
    $region7: #{tpu_custom_call.1} parent=1 // pred_check_branch
      %19 = sbr.rel (0) target = $region9
    $region8: #{tpu_custom_call.1} parent=1 // pred_region
      %20 = dma.done [#allocation3], 16
    $region9: #{tpu_custom_call.1} parent=1 // pred_fallthru
      _
    %v21 = vld [vmem:[#allocation2] sm:$0x1]
    %22 = vst [vmem:[#allocation5] sm:$0x1] %v21
    // Predicated region
    $region10: #{tpu_custom_call.1} parent=1 // pred_check
      _
    $region11: #{tpu_custom_call.1} parent=1 // pred_check_branch
      %24 = sbr.rel (0) target = $region13
    $region12: #{tpu_custom_call.1} parent=1 // pred_region
      %s26 = ssub.s32 16, 16
      %27 = vsyncadd [#allocation4], %s26
      %s29 = sshll.u32 [#allocation5], 4
      %s30 = int_to_ptr.vmem [resolvable:$true] %s29
      %32 = dma.vmem_to_hbm [thread:$0]  %s30, 16, %s1, [#allocation4]
    $region13: #{tpu_custom_call.1} parent=1 // pred_fallthru
      _
    // Predicated region
    $region14: #{tpu_custom_call.1} parent=1 // pred_check
      _
    $region15: #{tpu_custom_call.1} parent=1 // pred_check_branch
      %34 = sbr.rel (0) target = $region17
    $region16: #{tpu_custom_call.1} parent=1 // pred_region
      %35 = dma.done [#allocation4], 16
    $region17: #{tpu_custom_call.1} parent=1 // pred_fallthru
      _
    %36 = vsyncpa [#allocation3], 1
    %37 = vsyncpa [#allocation4], 1

</llo_original>
